<compile_context>
chip_gen: v6e
topology: v6e:2x2x1
jax: 0.10.0
libtpu: 0.0.40
codegen_flags: <defaults>
</compile_context>

<pallas_src>
import functools

import jax
import jax.numpy as jnp
from jax import lax
from jax.experimental import pallas as pl
from jax.experimental.pallas import tpu as pltpu

_NEG_LARGE = float(jnp.finfo(jnp.float32).min)
_HALO_PAD = 8   # sublane-aligned halo region; only the last K-1 rows are consumed


def _round_up(x, m):
    return ((x + m - 1) // m) * m


def _cnn_kernel(x_ref, w_ref, b_ref, fcw_ref, fcb_ref, o_ref,
                mmax_ref, xe_ref, *, K, L, TT):
    """One (batch_tile, time_tile) grid step.

    x_ref   : (TB, TT, F)          input tile
    w_ref   : (K, F, C)            conv taps (tap-major)
    b_ref   : (1, C)               conv bias (applied after the pool)
    fcw_ref : (C, n_out)           fc weight
    fcb_ref : (1, n_out)           fc bias
    o_ref   : (TB, n_out)          output (written on the last time step only)
    mmax_ref: (TB, C) f32          running max over conv positions (online pool)
    xe_ref  : (TB, HALO+TT, F)     rows [HALO-K+1, HALO) = previous tile's tail,
                                   rows [HALO, HALO+TT) = current tile
    """
    PAD = _HALO_PAD
    K1 = K - 1
    j = pl.program_id(1)                       # time-tile index ("arbitrary" axis)
    tb, _, f = xe_ref.shape
    C = w_ref.shape[2]

    # ---- per-batch-tile init (first time step) ------------------------------
    @pl.when(j == 0)
    def _init():
        mmax_ref[...] = jnp.full(mmax_ref.shape, _NEG_LARGE, jnp.float32)
        xe_ref[:, 0:PAD, :] = jnp.zeros((tb, PAD, f), xe_ref.dtype)

    # ---- stage the current tile next to the halo (aligned stores) -----------
    x_tile = x_ref[...]
    xe_ref[:, PAD:PAD + TT, :] = x_tile
    x_ext = xe_ref[...]                        # (TB, PAD+TT, F)

    # ---- 3-tap valid conv, f32 accumulation ----------------------------------
    # extended position l in [0, TT) maps to global conv position
    # t = j*TT - (K-1) + l and uses rows x_ext[l : l+K] (halo covers l < K-1).
    acc = jnp.zeros((tb, TT, C), jnp.float32)
    for k in range(K):                         # statically unrolled (K = 3)
        xs = x_ext[:, PAD - K1 + k: PAD - K1 + k + TT, :]
        acc = acc + lax.dot_general(
            xs, w_ref[k],
            dimension_numbers=(((2,), (0,)), ((), ())),
            preferred_element_type=jnp.float32)

    # ---- mask invalid positions (left edge of first tile, right padding) ----
    lidx = lax.broadcasted_iota(jnp.int32, (1, TT, 1), 1)
    t_glob = j * TT - K1 + lidx
    valid = jnp.logical_and(t_glob >= 0, t_glob < L)
    acc = jnp.where(valid, acc, _NEG_LARGE)

    # ---- online max-pool ------------------------------------------------------
    mmax_ref[...] = jnp.maximum(mmax_ref[...], jnp.max(acc, axis=1))

    # ---- stash this tile's tail as the next step's halo (aligned 8-row store)
    xe_ref[:, 0:PAD, :] = x_tile[:, TT - PAD:TT, :]

    # ---- epilogue on the last time step: bias + ReLU (hoisted past max) + FC -
    @pl.when(j == pl.num_programs(1) - 1)
    def _finish():
        pooled = jnp.maximum(mmax_ref[...] + b_ref[...], 0.0)
        out = jnp.dot(pooled, fcw_ref[...],
                      preferred_element_type=jnp.float32) + fcb_ref[...]
        o_ref[...] = out.astype(o_ref.dtype)


def cnn_model_forward(x, conv_w_kfc, conv_b2, fc_w, fc_b2, *,
                      batch_tile=8, t_tile=512):
    """CNNModel forward.

    x           : (B, T, F) input (PyTorch module's input layout)
    conv_w_kfc  : (K, F, 32) conv weights (see pack_params)
    conv_b2     : (1, 32)
    fc_w        : (32, n_out)
    fc_b2       : (1, n_out)
    """
    B, T, F = x.shape
    K, Fw, C = conv_w_kfc.shape
    assert Fw == F, "feature-dim mismatch between x and conv weights"
    n_out = fc_w.shape[1]
    if T < K:
        raise ValueError(f"sequence length T={T} must be >= kernel_size K={K}")
    L = T - K + 1                               # valid conv output length

    # Time tiling: multiple-of-8 tiles, pad T up to a whole number of tiles.
    TT = min(_round_up(T, 8), max(8, _round_up(t_tile, 8)))
    T_pad = _round_up(T, TT)
    if T_pad != T:
        x = jnp.pad(x, ((0, 0), (0, T_pad - T), (0, 0)))
    nt = T_pad // TT

    # Batch tiling ("parallel" grid axis -> sharded across TensorCores).
    TB = B if B <= batch_tile else max(8, (batch_tile // 8) * 8)
    nb = pl.cdiv(B, TB)

    kernel = functools.partial(_cnn_kernel, K=K, L=L, TT=TT)

    grid_spec = pltpu.PrefetchScalarGridSpec(
        num_scalar_prefetch=0,
        grid=(nb, nt),
        in_specs=[
            pl.BlockSpec((TB, TT, F), lambda i, j: (i, j, 0)),   # x: pipelined tiles
            pl.BlockSpec((K, F, C), lambda i, j: (0, 0, 0)),     # conv W (resident)
            pl.BlockSpec((1, C), lambda i, j: (0, 0)),           # conv b
            pl.BlockSpec((C, n_out), lambda i, j: (0, 0)),       # fc W
            pl.BlockSpec((1, n_out), lambda i, j: (0, 0)),       # fc b
        ],
        out_specs=pl.BlockSpec((TB, n_out), lambda i, j: (i, 0)),
        scratch_shapes=[
            pltpu.VMEM((TB, C), jnp.float32),                    # online max state
            pltpu.VMEM((TB, TT + _HALO_PAD, F), x.dtype),        # halo + staged tile
        ],
    )

    return pl.pallas_call(
        kernel,
        out_shape=jax.ShapeDtypeStruct((B, n_out), jnp.float32),
        grid_spec=grid_spec,
        compiler_params=pltpu.CompilerParams(
            dimension_semantics=("parallel", "arbitrary")),
    )(x, conv_w_kfc, conv_b2, fc_w, fc_b2)


def pack_params(conv_w_torch, conv_b, fc_w_torch, fc_b, compute_dtype=jnp.float32):
    """One-time host-side repack from PyTorch layouts to kernel layouts.

    conv_w_torch: (C_out, F, K)  nn.Conv1d weight
    fc_w_torch  : (n_out, C_out) nn.Linear weight
    compute_dtype: dtype fed to the MXU (use bf16 with bf16 activations on v6e/v7x).
    """
    w_kfc = jnp.asarray(conv_w_torch).transpose(2, 1, 0).astype(compute_dtype)  # (K, F, C)
    b2 = jnp.asarray(conv_b).reshape(1, -1).astype(jnp.float32)
    fw = jnp.asarray(fc_w_torch).T.astype(jnp.float32)
    fb = jnp.asarray(fc_b).reshape(1, -1).astype(jnp.float32)
    return w_kfc, b2, fw, fb


def reference_forward(x, conv_w_torch, conv_b, fc_w_torch, fc_b):
    """Pure-JAX reference mirroring the PyTorch forward exactly."""
    B, T, F = x.shape
    C_out, _, K = conv_w_torch.shape
    L = T - K + 1
    xp = jnp.transpose(x, (0, 2, 1))                    # permute(0, 2, 1)
    conv = jnp.zeros((B, C_out, L), jnp.float32)
    for k in range(K):
        conv = conv + jnp.einsum('bfl,of->bol',
                                 xp[:, :, k:k + L], conv_w_torch[:, :, k])
    conv = conv + conv_b[None, :, None]
    conv = jnp.maximum(conv, 0.0)
    pooled = jnp.max(conv, axis=-1)                     # AdaptiveMaxPool1d(1).squeeze(-1)
    return pooled @ fc_w_torch.T + fc_b[None, :]


def _run_case(key, *, B, T, F, n_out, batch_tile, t_tile, tag):
    C_out, K = 32, 3
    k_x, k_cw, k_cb, k_fw, k_fb = jax.random.split(key, 5)
    x = jax.random.normal(k_x, (B, T, F), dtype=jnp.float32)
    conv_w_torch = 0.1 * jax.random.normal(k_cw, (C_out, F, K), dtype=jnp.float32)
    conv_b = 0.1 * jax.random.normal(k_cb, (C_out,), dtype=jnp.float32)
    fc_w_torch = 0.1 * jax.random.normal(k_fw, (n_out, C_out), dtype=jnp.float32)
    fc_b = 0.1 * jax.random.normal(k_fb, (n_out,), dtype=jnp.float32)

    params = pack_params(conv_w_torch, conv_b, fc_w_torch, fc_b,
                         compute_dtype=x.dtype)
    out = cnn_model_forward(x, *params, batch_tile=batch_tile, t_tile=t_tile)
    out = jax.block_until_ready(out)

    ref = reference_forward(x, conv_w_torch, conv_b, fc_w_torch, fc_b)
    assert out.shape == (B, n_out), f"{tag}: bad output shape {out.shape}"
    err = float(jnp.max(jnp.abs(out - ref)))
    assert jnp.allclose(out, ref, atol=1e-3, rtol=1e-3), (
        f"{tag}: mismatch vs reference (max abs err {err})")


if __name__ == "__main__":
    key = jax.random.PRNGKey(0)
    k1, k2 = jax.random.split(key)
    # Small shapes implied by the module: batch=2, seq=8, n_features=4, n_out=3.
    _run_case(k1, B=2, T=8, F=4, n_out=3, batch_tile=8, t_tile=512,
              tag="single-tile")
    # Exercise the multi-time-tile path: T=50 padded to 64 -> 4 tiles of 16,
    # halo carry + online max + edge/padding masking.
    _run_case(k2, B=3, T=50, F=4, n_out=3, batch_tile=8, t_tile=16,
              tag="multi-tile")
    print("KERNEL_OK")
</pallas_src>

<mosaic_0001>
module attributes {stable_mosaic.version = 11 : i64} {
  func.func @_cnn_kernel(%arg0: i32, %arg1: i32, %arg2: memref<2x8x4xf32, #tpu.memory_space<vmem>>, %arg3: memref<3x4x32xf32, #tpu.memory_space<vmem>>, %arg4: memref<1x32xf32, #tpu.memory_space<vmem>>, %arg5: memref<32x3xf32, #tpu.memory_space<vmem>>, %arg6: memref<1x3xf32, #tpu.memory_space<vmem>>, %arg7: memref<2x3xf32, #tpu.memory_space<vmem>>, %arg8: memref<2x32xf32, #tpu.memory_space<vmem>>, %arg9: memref<2x16x4xf32, #tpu.memory_space<vmem>>) attributes {dimension_semantics = [#tpu.dimension_semantics<parallel>, #tpu.dimension_semantics<arbitrary>], iteration_bounds = array<i64: 1, 1>, scalar_prefetch = 0 : i64, scratch_operands = 2 : i64, tpu.core_type = #tpu.core_type<tc>, window_params = [{transform_indices = @transform_0, window_bounds = array<i64: 2, 8, 4>}, {pipeline_mode = #tpu.pipeline_mode<synchronous>, transform_indices = @transform_1, window_bounds = array<i64: 3, 4, 32>}, {pipeline_mode = #tpu.pipeline_mode<synchronous>, transform_indices = @transform_2, window_bounds = array<i64: 1, 32>}, {pipeline_mode = #tpu.pipeline_mode<synchronous>, transform_indices = @transform_3, window_bounds = array<i64: 32, 3>}, {pipeline_mode = #tpu.pipeline_mode<synchronous>, transform_indices = @transform_4, window_bounds = array<i64: 1, 3>}, {transform_indices = @transform_5, window_bounds = array<i64: 2, 3>}]} {
    %c0_i32 = arith.constant 0 : i32
    %0 = arith.cmpi eq, %arg1, %c0_i32 : i32
    %1 = arith.extui %0 : i1 to i32
    %c0_i32_0 = arith.constant 0 : i32
    %2 = arith.cmpi ne, %1, %c0_i32_0 : i32
    scf.if %2 {
      %cst_30 = arith.constant -3.40282347E+38 : f32
      %44 = vector.broadcast %cst_30 : f32 to vector<2x32xf32>
      %c0_31 = arith.constant 0 : index
      %c0_32 = arith.constant 0 : index
      %45 = vector.load %arg8[%c0_31, %c0_32] : memref<2x32xf32, #tpu.memory_space<vmem>>, vector<2x32xf32>
      tpu.vector_store %arg8[%c0_31, %c0_32], %44 {strides = array<i32>} : memref<2x32xf32, #tpu.memory_space<vmem>>, vector<2x32xf32>,
      %cst_33 = arith.constant 0.000000e+00 : f32
      %46 = vector.broadcast %cst_33 : f32 to vector<2x8x4xf32>
      %c0_34 = arith.constant 0 : index
      %c0_35 = arith.constant 0 : index
      %c0_36 = arith.constant 0 : index
      %47 = vector.load %arg9[%c0_34, %c0_35, %c0_36] : memref<2x16x4xf32, #tpu.memory_space<vmem>>, vector<2x8x4xf32>
      tpu.vector_store %arg9[%c0_34, %c0_35, %c0_36], %46 {strides = array<i32>} : memref<2x16x4xf32, #tpu.memory_space<vmem>>, vector<2x8x4xf32>,
    } else {
    }
    %c0 = arith.constant 0 : index
    %c0_1 = arith.constant 0 : index
    %c0_2 = arith.constant 0 : index
    %3 = vector.load %arg2[%c0, %c0_1, %c0_2] : memref<2x8x4xf32, #tpu.memory_space<vmem>>, vector<2x8x4xf32>
    %c0_3 = arith.constant 0 : index
    %c8 = arith.constant 8 : index
    %c0_4 = arith.constant 0 : index
    %4 = vector.load %arg9[%c0_3, %c8, %c0_4] : memref<2x16x4xf32, #tpu.memory_space<vmem>>, vector<2x8x4xf32>
    tpu.vector_store %arg9[%c0_3, %c8, %c0_4], %3 {strides = array<i32>} : memref<2x16x4xf32, #tpu.memory_space<vmem>>, vector<2x8x4xf32>,
    %c0_5 = arith.constant 0 : index
    %c0_6 = arith.constant 0 : index
    %c0_7 = arith.constant 0 : index
    %5 = vector.load %arg9[%c0_5, %c0_6, %c0_7] : memref<2x16x4xf32, #tpu.memory_space<vmem>>, vector<2x16x4xf32>
    %cst = arith.constant 0.000000e+00 : f32
    %6 = vector.broadcast %cst : f32 to vector<2x8x32xf32>
    %7 = vector.extract_strided_slice %5 {offsets = [0, 6, 0], sizes = [2, 8, 4], strides = [1, 1, 1]} : vector<2x16x4xf32> to vector<2x8x4xf32>
    %c0_8 = arith.constant 0 : index
    %c0_9 = arith.constant 0 : index
    %c0_10 = arith.constant 0 : index
    %8 = vector.load %arg3[%c0_8, %c0_9, %c0_10] : memref<3x4x32xf32, #tpu.memory_space<vmem>>, vector<1x4x32xf32>
    %9 = vector.shape_cast %8 : vector<1x4x32xf32> to vector<4x32xf32>
    %cst_11 = arith.constant dense<0.000000e+00> : vector<2x8x32xf32>
    %10 = tpu.matmul %7, %9, %cst_11 {dimension_numbers = #tpu.dot_dimension_numbers<[2], [0], [0, 1], [1], [0, 0, 0, 1, 1, 1], [], []>} : vector<2x8x4xf32>, vector<4x32xf32>, vector<2x8x32xf32> -> vector<2x8x32xf32>
    %11 = arith.addf %6, %10 : vector<2x8x32xf32>
    %12 = vector.extract_strided_slice %5 {offsets = [0, 7, 0], sizes = [2, 8, 4], strides = [1, 1, 1]} : vector<2x16x4xf32> to vector<2x8x4xf32>
    %c1 = arith.constant 1 : index
    %c0_12 = arith.constant 0 : index
    %c0_13 = arith.constant 0 : index
    %13 = vector.load %arg3[%c1, %c0_12, %c0_13] : memref<3x4x32xf32, #tpu.memory_space<vmem>>, vector<1x4x32xf32>
    %14 = vector.shape_cast %13 : vector<1x4x32xf32> to vector<4x32xf32>
    %cst_14 = arith.constant dense<0.000000e+00> : vector<2x8x32xf32>
    %15 = tpu.matmul %12, %14, %cst_14 {dimension_numbers = #tpu.dot_dimension_numbers<[2], [0], [0, 1], [1], [0, 0, 0, 1, 1, 1], [], []>} : vector<2x8x4xf32>, vector<4x32xf32>, vector<2x8x32xf32> -> vector<2x8x32xf32>
    %16 = arith.addf %11, %15 : vector<2x8x32xf32>
    %17 = vector.extract_strided_slice %5 {offsets = [0, 8, 0], sizes = [2, 8, 4], strides = [1, 1, 1]} : vector<2x16x4xf32> to vector<2x8x4xf32>
    %c2 = arith.constant 2 : index
    %c0_15 = arith.constant 0 : index
    %c0_16 = arith.constant 0 : index
    %18 = vector.load %arg3[%c2, %c0_15, %c0_16] : memref<3x4x32xf32, #tpu.memory_space<vmem>>, vector<1x4x32xf32>
    %19 = vector.shape_cast %18 : vector<1x4x32xf32> to vector<4x32xf32>
    %cst_17 = arith.constant dense<0.000000e+00> : vector<2x8x32xf32>
    %20 = tpu.matmul %17, %19, %cst_17 {dimension_numbers = #tpu.dot_dimension_numbers<[2], [0], [0, 1], [1], [0, 0, 0, 1, 1, 1], [], []>} : vector<2x8x4xf32>, vector<4x32xf32>, vector<2x8x32xf32> -> vector<2x8x32xf32>
    %21 = arith.addf %16, %20 : vector<2x8x32xf32>
    %22 = tpu.iota {dimensions = array<i32: 1>} : vector<1x8x1xi32>
    %c8_i32 = arith.constant 8 : i32
    %23 = arith.muli %arg1, %c8_i32 : i32
    %c2_i32 = arith.constant 2 : i32
    %24 = arith.subi %23, %c2_i32 : i32
    %25 = vector.broadcast %24 : i32 to vector<1x8x1xi32>
    %26 = arith.addi %25, %22 : vector<1x8x1xi32>
    %c0_i32_18 = arith.constant 0 : i32
    %27 = vector.broadcast %c0_i32_18 : i32 to vector<1x8x1xi32>
    %28 = arith.cmpi sge, %26, %27 : vector<1x8x1xi32>
    %c6_i32 = arith.constant 6 : i32
    %29 = vector.broadcast %c6_i32 : i32 to vector<1x8x1xi32>
    %30 = arith.cmpi slt, %26, %29 : vector<1x8x1xi32>
    %31 = arith.andi %28, %30 : vector<1x8x1xi1>
    %cst_19 = arith.constant -3.40282347E+38 : f32
    %32 = vector.shape_cast %31 : vector<1x8x1xi1> to vector<1x8x1xi1>
    %33 = vector.broadcast %32 : vector<1x8x1xi1> to vector<2x8x32xi1>
    %34 = vector.broadcast %cst_19 : f32 to vector<2x8x32xf32>
    %35 = arith.select %33, %21, %34 : vector<2x8x32xi1>, vector<2x8x32xf32>
    %c0_20 = arith.constant 0 : index
    %c0_21 = arith.constant 0 : index
    %36 = vector.load %arg8[%c0_20, %c0_21] : memref<2x32xf32, #tpu.memory_space<vmem>>, vector<2x32xf32>
    %cst_22 = arith.constant dense<0xFF800000> : vector<2x32xf32>
    %37 = vector.multi_reduction <maximumf>, %35, %cst_22 [1] : vector<2x8x32xf32> to vector<2x32xf32>
    %38 = arith.maximumf %36, %37 : vector<2x32xf32>
    %c0_23 = arith.constant 0 : index
    %c0_24 = arith.constant 0 : index
    %39 = vector.load %arg8[%c0_23, %c0_24] : memref<2x32xf32, #tpu.memory_space<vmem>>, vector<2x32xf32>
    tpu.vector_store %arg8[%c0_23, %c0_24], %38 {strides = array<i32>} : memref<2x32xf32, #tpu.memory_space<vmem>>, vector<2x32xf32>,
    %c0_25 = arith.constant 0 : index
    %c0_26 = arith.constant 0 : index
    %c0_27 = arith.constant 0 : index
    %40 = vector.load %arg9[%c0_25, %c0_26, %c0_27] : memref<2x16x4xf32, #tpu.memory_space<vmem>>, vector<2x8x4xf32>
    tpu.vector_store %arg9[%c0_25, %c0_26, %c0_27], %3 {strides = array<i32>} : memref<2x16x4xf32, #tpu.memory_space<vmem>>, vector<2x8x4xf32>,
    %c0_i32_28 = arith.constant 0 : i32
    %41 = arith.cmpi eq, %arg1, %c0_i32_28 : i32
    %42 = arith.extui %41 : i1 to i32
    %c0_i32_29 = arith.constant 0 : i32
    %43 = arith.cmpi ne, %42, %c0_i32_29 : i32
    scf.if %43 {
      %c0_30 = arith.constant 0 : index
      %c0_31 = arith.constant 0 : index
      %44 = vector.load %arg8[%c0_30, %c0_31] : memref<2x32xf32, #tpu.memory_space<vmem>>, vector<2x32xf32>
      %c0_32 = arith.constant 0 : index
      %c0_33 = arith.constant 0 : index
      %45 = vector.load %arg4[%c0_32, %c0_33] : memref<1x32xf32, #tpu.memory_space<vmem>>, vector<1x32xf32>
      %46 = vector.broadcast %45 : vector<1x32xf32> to vector<2x32xf32>
      %47 = arith.addf %44, %46 : vector<2x32xf32>
      %cst_34 = arith.constant 0.000000e+00 : f32
      %48 = vector.broadcast %cst_34 : f32 to vector<2x32xf32>
      %49 = arith.maximumf %47, %48 : vector<2x32xf32>
      %c0_35 = arith.constant 0 : index
      %c0_36 = arith.constant 0 : index
      %50 = vector.load %arg5[%c0_35, %c0_36] : memref<32x3xf32, #tpu.memory_space<vmem>>, vector<32x3xf32>
      %cst_37 = arith.constant dense<0.000000e+00> : vector<2x3xf32>
      %51 = tpu.matmul %49, %50, %cst_37 {dimension_numbers = #tpu.dot_dimension_numbers<[1], [0], [0], [1], [0, 0, 1, 1], [], []>} : vector<2x32xf32>, vector<32x3xf32>, vector<2x3xf32> -> vector<2x3xf32>
      %c0_38 = arith.constant 0 : index
      %c0_39 = arith.constant 0 : index
      %52 = vector.load %arg6[%c0_38, %c0_39] : memref<1x3xf32, #tpu.memory_space<vmem>>, vector<1x3xf32>
      %53 = vector.broadcast %52 : vector<1x3xf32> to vector<2x3xf32>
      %54 = arith.addf %51, %53 : vector<2x3xf32>
      %c0_40 = arith.constant 0 : index
      %c0_41 = arith.constant 0 : index
      %55 = vector.load %arg7[%c0_40, %c0_41] : memref<2x3xf32, #tpu.memory_space<vmem>>, vector<2x3xf32>
      tpu.vector_store %arg7[%c0_40, %c0_41], %54 {strides = array<i32>} : memref<2x3xf32, #tpu.memory_space<vmem>>, vector<2x3xf32>,
    } else {
    }
    return
  }
  func.func @transform_0(%arg0: i32, %arg1: i32) -> (i32, i32, i32) {
    %c0_i32 = arith.constant 0 : i32
    %c0_i32_0 = arith.constant 0 : i32
    return %arg0, %arg1, %c0_i32 : i32, i32, i32
  }
  func.func @transform_1(%arg0: i32, %arg1: i32) -> (i32, i32, i32) {
    %c0_i32 = arith.constant 0 : i32
    %c0_i32_0 = arith.constant 0 : i32
    %c0_i32_1 = arith.constant 0 : i32
    %c0_i32_2 = arith.constant 0 : i32
    return %c0_i32, %c0_i32_0, %c0_i32_1 : i32, i32, i32
  }
  func.func @transform_2(%arg0: i32, %arg1: i32) -> (i32, i32) {
    %c0_i32 = arith.constant 0 : i32
    %c0_i32_0 = arith.constant 0 : i32
    %c0_i32_1 = arith.constant 0 : i32
    return %c0_i32, %c0_i32_0 : i32, i32
  }
  func.func @transform_3(%arg0: i32, %arg1: i32) -> (i32, i32) {
    %c0_i32 = arith.constant 0 : i32
    %c0_i32_0 = arith.constant 0 : i32
    %c0_i32_1 = arith.constant 0 : i32
    return %c0_i32, %c0_i32_0 : i32, i32
  }
  func.func @transform_4(%arg0: i32, %arg1: i32) -> (i32, i32) {
    %c0_i32 = arith.constant 0 : i32
    %c0_i32_0 = arith.constant 0 : i32
    %c0_i32_1 = arith.constant 0 : i32
    return %c0_i32, %c0_i32_0 : i32, i32
  }
  func.func @transform_5(%arg0: i32, %arg1: i32) -> (i32, i32) {
    %c0_i32 = arith.constant 0 : i32
    %c0_i32_0 = arith.constant 0 : i32
    return %arg0, %c0_i32 : i32, i32
  }
}

</mosaic_0001>

<llo_original>
// kernel: tpu_custom_call.1
$region0: #{tpu_custom_call.1}
  #allocation0 [shape = 'u32[]', space=smem, size = 0x4, offset = 0x4, fixed_abs, tag = 'smem constant byte address 0x4 - core index']
  #allocation1 [shape = 'u32[144,128]{1,0:T(1,128)}', space=vmem, size = 0x12000, scoped, tag = 'internal scratch']
  #allocation2 [shape = 'f32[2,32]{1,0:T(2,128)}', space=vmem, size = 0x400, scoped, tag = 'scratch operand']
  #allocation3 [shape = 'f32[2,16,4]{2,1,0:T(8,128)}', space=vmem, size = 0x4000, scoped, tag = 'scratch operand']
  %s0 = inlined_call_operand.vmem [shape: f32[2,8,4], index: 0, kind: input, shape index: {}]
  %s1 = inlined_call_operand.vmem [shape: f32[3,4,32], index: 1, kind: input, shape index: {}]
  %s2 = inlined_call_operand.vmem [shape: f32[1,32], index: 2, kind: input, shape index: {}]
  %s3 = inlined_call_operand.vmem [shape: f32[32,3], index: 3, kind: input, shape index: {}]
  %s4 = inlined_call_operand.vmem [shape: f32[1,3], index: 4, kind: input, shape index: {}]
  %s5 = inlined_call_operand.hbm [shape: f32[2,3], index: 5, kind: output, shape index: {}]
  %s6 = sld [smem:[#allocation0]]
  $region38: #{tpu_custom_call.1} parent=0
    _
  %s8 = ssub.s32 1, %s6
  %s9 = scalar_select 0, %s8, %s6
  $region1: #{tpu_custom_call.1} parent=0
    #allocation4 [shape = 'u8[1024]{0}', space=vmem, size = 0x400, scoped, tag = 'output window, operand 0, single buffered']
    #allocation5 [shape = 's32[1]{0}', space=sflag, size = 0x4, scoped, tag = 'scoped memory for tpu_custom_call.1']
    %10 = vsyncpa [#allocation5], 0
    // Predicated region
    $region2: #{tpu_custom_call.1} parent=1 // pred_check
      _
    $region3: #{tpu_custom_call.1} parent=1 // pred_check_branch
      %12 = sbr.rel (0) target = $region5
    $region4: #{tpu_custom_call.1} parent=1 // pred_region
      _
    $region5: #{tpu_custom_call.1} parent=1 // pred_fallthru
      _
    // Predicated region
    $region6: #{tpu_custom_call.1} parent=1 // pred_check
      _
    $region7: #{tpu_custom_call.1} parent=1 // pred_check_branch
      %14 = sbr.rel (0) target = $region9
    $region8: #{tpu_custom_call.1} parent=1 // pred_region
      _
    $region9: #{tpu_custom_call.1} parent=1 // pred_fallthru
      _
    // Predicated region
    $region10: #{tpu_custom_call.1} parent=1 // pred_check
      _
    $region11: #{tpu_custom_call.1} parent=1 // pred_check_branch
      %16 = sbr.rel (0) target = $region13
    $region12: #{tpu_custom_call.1} parent=1 // pred_region
      _
    $region13: #{tpu_custom_call.1} parent=1 // pred_fallthru
      _
    // Predicated region
    $region14: #{tpu_custom_call.1} parent=1 // pred_check
      _
    $region15: #{tpu_custom_call.1} parent=1 // pred_check_branch
      %18 = sbr.rel (0) target = $region17
    $region16: #{tpu_custom_call.1} parent=1 // pred_region
      _
    $region17: #{tpu_custom_call.1} parent=1 // pred_fallthru
      _
    // Predicated region
    $region18: #{tpu_custom_call.1} parent=1 // pred_check
      _
    $region19: #{tpu_custom_call.1} parent=1 // pred_check_branch
      %20 = sbr.rel (0) target = $region21
    $region20: #{tpu_custom_call.1} parent=1 // pred_region
      _
    $region21: #{tpu_custom_call.1} parent=1 // pred_fallthru
      _
    %p21 = scmp.eq.s32.totalorder 0, 0
    // Predicated region
    $region22: #{tpu_custom_call.1} parent=1 // pred_check
      %p22 = pneg %p21
    $region23: #{tpu_custom_call.1} parent=1 // pred_check_branch
      %24 = sbr.rel (%p22) target = $region25
    $region24: #{tpu_custom_call.1} parent=1 // pred_region
      %vm25 = vcmask 254976
      %26 = vst.msk [vmem:[#allocation2] sm:$0x3] %vm25, -3.4028235e+38
      %vm27 = vcmask 31744
      %28 = vst.msk [vmem:[#allocation3] sm:$0xff] %vm27, 0.0
      %29 = vst.msk [vmem:[#allocation3 + $0x10] sm:$0xff] %vm27, 0.0
    $region25: #{tpu_custom_call.1} parent=1 // pred_fallthru
      _
    %v30 = vld [vmem:[%s0] sm:$0xff]
    %v31 = vld [vmem:[%s0 + $0x8] sm:$0xff]
    %vm32 = vcmask 31744
    %33 = vst.msk [vmem:[#allocation3 + $0x8] sm:$0xff] %vm32, %v30
    %34 = vst.msk [vmem:[#allocation3 + $0x18] sm:$0xff] %vm32, %v31
    %v35 = vld [vmem:[#allocation3] sm:$0xff]
    %v36 = vld [vmem:[#allocation3 + $0x8] sm:$0xff]
    %v37 = vld [vmem:[#allocation3 + $0x10] sm:$0xff]
    %v38 = vld [vmem:[#allocation3 + $0x18] sm:$0xff]
    %v39 = vld [vmem:[%s1] sm:$0xf]
    %s40 = scalar_lea.vmem %s1, 4
    %v41 = vld [vmem:[%s40] sm:$0xf]
    %vm46 = vcmask 1040384
    %v47 = vrot.slane %v35, 7
    %v48 = vrot.slane %v36, 7
    %v49 = vsel %vm46, %v47, %v48
    %v50 = vrot.slane %v37, 7
    %v51 = vrot.slane %v38, 7
    %v52 = vsel %vm46, %v50, %v51
    %v53 = vsel %vm32, %v49, 0
    %v55 = vsel %vm32, %v52, 0
    %vm57 = vcmask 1043456
    %v59 = vsel %vm57, %v41, 0
    %61 = vmatprep.subr.mxu0 0.0
    %62 = vmatpush1.msra.mxu0 0.0
    %63 = vmatprep.subr.mxu0 0.0
    %64 = vmatpush1.msra.mxu0 0.0
    %65 = vmatprep.subr.mxu0 0.0
    %66 = vmatpush1.msra.mxu0 0.0
    %67 = vmatprep.subr.mxu0 0.0
    %68 = vmatpush1.msra.mxu0 0.0
    %69 = vmatprep.subr.mxu0 0.0
    %70 = vmatpush1.msra.mxu0 0.0
    %71 = vmatprep.subr.mxu0 0.0
    %72 = vmatpush1.msra.mxu0 0.0
    %73 = vmatprep.subr.mxu0 0.0
    %74 = vmatpush1.msra.mxu0 0.0
    %75 = vmatprep.subr.mxu0 0.0
    %76 = vmatpush1.msra.mxu0 0.0
    %77 = vmatprep.subr.mxu0 0.0
    %78 = vmatpush1.msra.mxu0 0.0
    %79 = vmatprep.subr.mxu0 0.0
    %80 = vmatpush1.msra.mxu0 0.0
    %81 = vmatprep.subr.mxu0 0.0
    %82 = vmatpush1.msra.mxu0 0.0
    %83 = vmatprep.subr.mxu0 0.0
    %84 = vmatpush1.msra.mxu0 0.0
    %85 = vmatprep.subr.mxu0 0.0
    %86 = vmatpush1.msra.mxu0 0.0
    %87 = vmatprep.subr.mxu0 0.0
    %88 = vmatpush1.msra.mxu0 0.0
    %89 = vmatprep.subr.mxu0 0.0
    %90 = vmatpush1.msra.mxu0 0.0
    %91 = vmatprep.subr.mxu0 0.0
    %92 = vmatpush1.msra.mxu0 %v59
    %93 = vmatprep.subr.mxu0 0.0
    %94 = vmatpush2.msra.mxu0 0.0
    %95 = vmatprep.subr.mxu0 0.0
    %96 = vmatpush2.msra.mxu0 0.0
    %97 = vmatprep.subr.mxu0 0.0
    %98 = vmatpush2.msra.mxu0 0.0
    %99 = vmatprep.subr.mxu0 0.0
    %100 = vmatpush2.msra.mxu0 0.0
    %101 = vmatprep.subr.mxu0 0.0
    %102 = vmatpush2.msra.mxu0 0.0
    %103 = vmatprep.subr.mxu0 0.0
    %104 = vmatpush2.msra.mxu0 0.0
    %105 = vmatprep.subr.mxu0 0.0
    %106 = vmatpush2.msra.mxu0 0.0
    %107 = vmatprep.subr.mxu0 0.0
    %108 = vmatpush2.msra.mxu0 0.0
    %109 = vmatprep.subr.mxu0 0.0
    %110 = vmatpush2.msra.mxu0 0.0
    %111 = vmatprep.subr.mxu0 0.0
    %112 = vmatpush2.msra.mxu0 0.0
    %113 = vmatprep.subr.mxu0 0.0
    %114 = vmatpush2.msra.mxu0 0.0
    %115 = vmatprep.subr.mxu0 0.0
    %116 = vmatpush2.msra.mxu0 0.0
    %117 = vmatprep.subr.mxu0 0.0
    %118 = vmatpush2.msra.mxu0 0.0
    %119 = vmatprep.subr.mxu0 0.0
    %120 = vmatpush2.msra.mxu0 0.0
    %121 = vmatprep.subr.mxu0 0.0
    %122 = vmatpush2.msra.mxu0 0.0
    %123 = vmatprep.subr.mxu0 0.0
    %124 = vmatpush2.msra.mxu0 0.0
    %125 = vmatprep.mubr.f32.mxu0 0.0
    %126 = vmatmul.mubr.f32.gmra.mxu0 %v53
    %v127 = vpop.f32.mrf.mxu0
    %v128 = vadd.f32 0.0, %v127
    %v129 = vpop.f32.mrf.mxu0
    %130 = vmatprep.mubr.f32.mxu0 0.0
    %131 = vmatmul.mubr.f32.gmra.mxu0 %v55
    %v132 = vpop.f32.mrf.mxu0
    %v133 = vadd.f32 0.0, %v132
    %v134 = vpop.f32.mrf.mxu0
    %135 = vdwg.mxu0
    %vm136 = vcmask 1041408
    %v137 = vrot.slane %v35, 6
    %v138 = vrot.slane %v36, 6
    %v139 = vsel %vm136, %v137, %v138
    %v140 = vrot.slane %v37, 6
    %v141 = vrot.slane %v38, 6
    %v142 = vsel %vm136, %v140, %v141
    %v143 = vsel %vm32, %v139, 0
    %v145 = vsel %vm32, %v142, 0
    %v148 = vsel %vm57, %v39, 0
    %150 = vmatprep.subr.mxu0 0.0
    %151 = vmatpush1.msra.mxu0 0.0
    %152 = vmatprep.subr.mxu0 0.0
    %153 = vmatpush1.msra.mxu0 0.0
    %154 = vmatprep.subr.mxu0 0.0
    %155 = vmatpush1.msra.mxu0 0.0
    %156 = vmatprep.subr.mxu0 0.0
    %157 = vmatpush1.msra.mxu0 0.0
    %158 = vmatprep.subr.mxu0 0.0
    %159 = vmatpush1.msra.mxu0 0.0
    %160 = vmatprep.subr.mxu0 0.0
    %161 = vmatpush1.msra.mxu0 0.0
    %162 = vmatprep.subr.mxu0 0.0
    %163 = vmatpush1.msra.mxu0 0.0
    %164 = vmatprep.subr.mxu0 0.0
    %165 = vmatpush1.msra.mxu0 0.0
    %166 = vmatprep.subr.mxu0 0.0
    %167 = vmatpush1.msra.mxu0 0.0
    %168 = vmatprep.subr.mxu0 0.0
    %169 = vmatpush1.msra.mxu0 0.0
    %170 = vmatprep.subr.mxu0 0.0
    %171 = vmatpush1.msra.mxu0 0.0
    %172 = vmatprep.subr.mxu0 0.0
    %173 = vmatpush1.msra.mxu0 0.0
    %174 = vmatprep.subr.mxu0 0.0
    %175 = vmatpush1.msra.mxu0 0.0
    %176 = vmatprep.subr.mxu0 0.0
    %177 = vmatpush1.msra.mxu0 0.0
    %178 = vmatprep.subr.mxu0 0.0
    %179 = vmatpush1.msra.mxu0 0.0
    %180 = vmatprep.subr.mxu0 0.0
    %181 = vmatpush1.msra.mxu0 %v148
    %182 = vmatprep.subr.mxu0 0.0
    %183 = vmatpush2.msra.mxu0 0.0
    %184 = vmatprep.subr.mxu0 0.0
    %185 = vmatpush2.msra.mxu0 0.0
    %186 = vmatprep.subr.mxu0 0.0
    %187 = vmatpush2.msra.mxu0 0.0
    %188 = vmatprep.subr.mxu0 0.0
    %189 = vmatpush2.msra.mxu0 0.0
    %190 = vmatprep.subr.mxu0 0.0
    %191 = vmatpush2.msra.mxu0 0.0
    %192 = vmatprep.subr.mxu0 0.0
    %193 = vmatpush2.msra.mxu0 0.0
    %194 = vmatprep.subr.mxu0 0.0
    %195 = vmatpush2.msra.mxu0 0.0
    %196 = vmatprep.subr.mxu0 0.0
    %197 = vmatpush2.msra.mxu0 0.0
    %198 = vmatprep.subr.mxu0 0.0
    %199 = vmatpush2.msra.mxu0 0.0
    %200 = vmatprep.subr.mxu0 0.0
    %201 = vmatpush2.msra.mxu0 0.0
    %202 = vmatprep.subr.mxu0 0.0
    %203 = vmatpush2.msra.mxu0 0.0
    %204 = vmatprep.subr.mxu0 0.0
    %205 = vmatpush2.msra.mxu0 0.0
    %206 = vmatprep.subr.mxu0 0.0
    %207 = vmatpush2.msra.mxu0 0.0
    %208 = vmatprep.subr.mxu0 0.0
    %209 = vmatpush2.msra.mxu0 0.0
    %210 = vmatprep.subr.mxu0 0.0
    %211 = vmatpush2.msra.mxu0 0.0
    %212 = vmatprep.subr.mxu0 0.0
    %213 = vmatpush2.msra.mxu0 0.0
    %214 = vmatprep.mubr.f32.mxu0 0.0
    %215 = vmatmul.mubr.f32.gmra.mxu0 %v143
    %v216 = vpop.f32.mrf.mxu0
    %v217 = vadd.f32 %v128, %v216
    %v218 = vpop.f32.mrf.mxu0
    %219 = vmatprep.mubr.f32.mxu0 0.0
    %220 = vmatmul.mubr.f32.gmra.mxu0 %v145
    %v221 = vpop.f32.mrf.mxu0
    %v222 = vadd.f32 %v133, %v221
    %v223 = vpop.f32.mrf.mxu0
    %224 = vdwg.mxu0
    %s225 = scalar_lea.vmem %s1, 8
    %v226 = vld [vmem:[%s225] sm:$0xf]
    %v227 = vsel %vm32, %v36, 0
    %v229 = vsel %vm32, %v38, 0
    %v232 = vsel %vm57, %v226, 0
    %234 = vmatprep.subr.mxu0 0.0
    %235 = vmatpush1.msra.mxu0 0.0
    %236 = vmatprep.subr.mxu0 0.0
    %237 = vmatpush1.msra.mxu0 0.0
    %238 = vmatprep.subr.mxu0 0.0
    %239 = vmatpush1.msra.mxu0 0.0
    %240 = vmatprep.subr.mxu0 0.0
    %241 = vmatpush1.msra.mxu0 0.0
    %242 = vmatprep.subr.mxu0 0.0
    %243 = vmatpush1.msra.mxu0 0.0
    %244 = vmatprep.subr.mxu0 0.0
    %245 = vmatpush1.msra.mxu0 0.0
    %246 = vmatprep.subr.mxu0 0.0
    %247 = vmatpush1.msra.mxu0 0.0
    %248 = vmatprep.subr.mxu0 0.0
    %249 = vmatpush1.msra.mxu0 0.0
    %250 = vmatprep.subr.mxu0 0.0
    %251 = vmatpush1.msra.mxu0 0.0
    %252 = vmatprep.subr.mxu0 0.0
    %253 = vmatpush1.msra.mxu0 0.0
    %254 = vmatprep.subr.mxu0 0.0
    %255 = vmatpush1.msra.mxu0 0.0
    %256 = vmatprep.subr.mxu0 0.0
    %257 = vmatpush1.msra.mxu0 0.0
    %258 = vmatprep.subr.mxu0 0.0
    %259 = vmatpush1.msra.mxu0 0.0
    %260 = vmatprep.subr.mxu0 0.0
    %261 = vmatpush1.msra.mxu0 0.0
    %262 = vmatprep.subr.mxu0 0.0
    %263 = vmatpush1.msra.mxu0 0.0
    %264 = vmatprep.subr.mxu0 0.0
    %265 = vmatpush1.msra.mxu0 %v232
    %266 = vmatprep.subr.mxu0 0.0
    %267 = vmatpush2.msra.mxu0 0.0
    %268 = vmatprep.subr.mxu0 0.0
    %269 = vmatpush2.msra.mxu0 0.0
    %270 = vmatprep.subr.mxu0 0.0
    %271 = vmatpush2.msra.mxu0 0.0
    %272 = vmatprep.subr.mxu0 0.0
    %273 = vmatpush2.msra.mxu0 0.0
    %274 = vmatprep.subr.mxu0 0.0
    %275 = vmatpush2.msra.mxu0 0.0
    %276 = vmatprep.subr.mxu0 0.0
    %277 = vmatpush2.msra.mxu0 0.0
    %278 = vmatprep.subr.mxu0 0.0
    %279 = vmatpush2.msra.mxu0 0.0
    %280 = vmatprep.subr.mxu0 0.0
    %281 = vmatpush2.msra.mxu0 0.0
    %282 = vmatprep.subr.mxu0 0.0
    %283 = vmatpush2.msra.mxu0 0.0
    %284 = vmatprep.subr.mxu0 0.0
    %285 = vmatpush2.msra.mxu0 0.0
    %286 = vmatprep.subr.mxu0 0.0
    %287 = vmatpush2.msra.mxu0 0.0
    %288 = vmatprep.subr.mxu0 0.0
    %289 = vmatpush2.msra.mxu0 0.0
    %290 = vmatprep.subr.mxu0 0.0
    %291 = vmatpush2.msra.mxu0 0.0
    %292 = vmatprep.subr.mxu0 0.0
    %293 = vmatpush2.msra.mxu0 0.0
    %294 = vmatprep.subr.mxu0 0.0
    %295 = vmatpush2.msra.mxu0 0.0
    %296 = vmatprep.subr.mxu0 0.0
    %297 = vmatpush2.msra.mxu0 0.0
    %298 = vmatprep.mubr.f32.mxu0 0.0
    %299 = vmatmul.mubr.f32.gmra.mxu0 %v227
    %v300 = vpop.f32.mrf.mxu0
    %v301 = vadd.f32 0.0, %v300
    %v302 = vpop.f32.mrf.mxu0
    %303 = vmatprep.mubr.f32.mxu0 0.0
    %304 = vmatmul.mubr.f32.gmra.mxu0 %v229
    %v305 = vpop.f32.mrf.mxu0
    %v306 = vadd.f32 0.0, %v305
    %v307 = vpop.f32.mrf.mxu0
    %308 = vdwg.mxu0
    %v309 = vadd.f32 %v217, %v301
    %v310 = vadd.f32 %v222, %v306
    %v311 = vlaneseq
    %v312 = vshrl.u32 %v311, 7
    %s313 = smul.u32 0, 8
    %s314 = ssub.s32 %s313, 2
    %v315 = vstv %s314
    %v316 = vadd.s32 %v315, %v312
    %vm317 = vcmp.ge.s32.totalorder %v316, 0
    %vm318 = vcmp.lt.s32.totalorder %v316, 6
    %vm319 = vmand %vm317, %vm318
    %v320 = vsel %vm319, 1, 0
    %vm321 = vcmp.eq.s32.totalorder %v320, 1
    %v322 = vsel %vm321, %v309, -3.4028235e+38
    %v323 = vsel %vm321, %v310, -3.4028235e+38
    %v324 = vld [vmem:[#allocation2] sm:$0x3]
    %vm325 = vcmask 261120
    %v326 = vsel %vm325, %v322, -inf
    %v327 = vrot.slane %v326, 4
    %v328 = vmax.f32 %v326, %v327
    %v329 = vrot.slane %v328, 2
    %v330 = vmax.f32 %v328, %v329
    %v331 = vrot.slane %v330, 1
    %v332 = vmax.f32 %v330, %v331
    %v333 = vsel %vm325, %v323, -inf
    %v334 = vrot.slane %v333, 4
    %v335 = vmax.f32 %v333, %v334
    %v336 = vrot.slane %v335, 2
    %v337 = vmax.f32 %v335, %v336
    %v338 = vrot.slane %v337, 1
    %v339 = vmax.f32 %v337, %v338
    %vm342 = vcmask 1041409
    %v343 = vsel %vm342, %v339, %v332
    %v345 = vmax.f32 %v324, %v343
    %vm346 = vcmask 254976
    %347 = vst.msk [vmem:[#allocation2] sm:$0x3] %vm346, %v345
    %348 = vst.msk [vmem:[#allocation3] sm:$0xff] %vm32, %v30
    %349 = vst.msk [vmem:[#allocation3 + $0x10] sm:$0xff] %vm32, %v31
    // Predicated region
    $region26: #{tpu_custom_call.1} parent=1 // pred_check
      %p350 = pneg %p21
    $region27: #{tpu_custom_call.1} parent=1 // pred_check_branch
      %352 = sbr.rel (%p350) target = $region29
    $region28: #{tpu_custom_call.1} parent=1 // pred_region
      %v353 = vld [vmem:[#allocation2] sm:$0x3]
      %v354 = vld [vmem:[%s2] sm:$0x1]
      %v356 = vlaneseq
      %v357 = vshrl.u32 %v356, 7
      %v358 = vsub.s32 0, %v357
      %v359 = vrot.slane %v354, %v358
      %v361 = vadd.f32 %v353, %v359
      %v362 = vmax.f32 %v361, 0.0
      %v363 = vld [vmem:[%s3] sm:$0xff]
      %v364 = vld [vmem:[%s3 + $0x8] sm:$0xff]
      %v365 = vld [vmem:[%s3 + $0x10] sm:$0xff]
      %v366 = vld [vmem:[%s3 + $0x18] sm:$0xff]
      %v367 = vld [vmem:[%s4] sm:$0x1]
      %v369 = vlaneseq
      %v370 = vshrl.u32 %v369, 7
      %v371 = vsub.s32 0, %v370
      %v372 = vrot.slane %v367, %v371
      %v375 = vsel %vm325, %v362, 0
      %377 = vmatprep.subr.mxu0 0.0
      %378 = vmatpush1.msra.mxu0 0.0
      %379 = vmatprep.subr.mxu0 0.0
      %380 = vmatpush1.msra.mxu0 0.0
      %381 = vmatprep.subr.mxu0 0.0
      %382 = vmatpush1.msra.mxu0 0.0
      %383 = vmatprep.subr.mxu0 0.0
      %384 = vmatpush1.msra.mxu0 0.0
      %385 = vmatprep.subr.mxu0 0.0
      %386 = vmatpush1.msra.mxu0 0.0
      %387 = vmatprep.subr.mxu0 0.0
      %388 = vmatpush1.msra.mxu0 0.0
      %389 = vmatprep.subr.mxu0 0.0
      %390 = vmatpush1.msra.mxu0 0.0
      %391 = vmatprep.subr.mxu0 0.0
      %392 = vmatpush1.msra.mxu0 0.0
      %393 = vmatprep.subr.mxu0 0.0
      %394 = vmatpush1.msra.mxu0 0.0
      %395 = vmatprep.subr.mxu0 0.0
      %396 = vmatpush1.msra.mxu0 0.0
      %397 = vmatprep.subr.mxu0 0.0
      %398 = vmatpush1.msra.mxu0 0.0
      %399 = vmatprep.subr.mxu0 0.0
      %400 = vmatpush1.msra.mxu0 0.0
      %401 = vmatprep.subr.mxu0 0.0
      %402 = vmatpush1.msra.mxu0 %v366
      %403 = vmatprep.subr.mxu0 0.0
      %404 = vmatpush1.msra.mxu0 %v365
      %405 = vmatprep.subr.mxu0 0.0
      %406 = vmatpush1.msra.mxu0 %v364
      %407 = vmatprep.subr.mxu0 0.0
      %408 = vmatpush1.msra.mxu0 %v363
      %409 = vmatprep.subr.mxu0 0.0
      %410 = vmatpush2.msra.mxu0 0.0
      %411 = vmatprep.subr.mxu0 0.0
      %412 = vmatpush2.msra.mxu0 0.0
      %413 = vmatprep.subr.mxu0 0.0
      %414 = vmatpush2.msra.mxu0 0.0
      %415 = vmatprep.subr.mxu0 0.0
      %416 = vmatpush2.msra.mxu0 0.0
      %417 = vmatprep.subr.mxu0 0.0
      %418 = vmatpush2.msra.mxu0 0.0
      %419 = vmatprep.subr.mxu0 0.0
      %420 = vmatpush2.msra.mxu0 0.0
      %421 = vmatprep.subr.mxu0 0.0
      %422 = vmatpush2.msra.mxu0 0.0
      %423 = vmatprep.subr.mxu0 0.0
      %424 = vmatpush2.msra.mxu0 0.0
      %425 = vmatprep.subr.mxu0 0.0
      %426 = vmatpush2.msra.mxu0 0.0
      %427 = vmatprep.subr.mxu0 0.0
      %428 = vmatpush2.msra.mxu0 0.0
      %429 = vmatprep.subr.mxu0 0.0
      %430 = vmatpush2.msra.mxu0 0.0
      %431 = vmatprep.subr.mxu0 0.0
      %432 = vmatpush2.msra.mxu0 0.0
      %433 = vmatprep.subr.mxu0 0.0
      %434 = vmatpush2.msra.mxu0 0.0
      %435 = vmatprep.subr.mxu0 0.0
      %436 = vmatpush2.msra.mxu0 0.0
      %437 = vmatprep.subr.mxu0 0.0
      %438 = vmatpush2.msra.mxu0 0.0
      %439 = vmatprep.subr.mxu0 0.0
      %440 = vmatpush2.msra.mxu0 0.0
      %441 = vmatprep.mubr.f32.mxu0 0.0
      %442 = vmatmul.mubr.f32.gmra.mxu0 %v375
      %v443 = vpop.f32.mrf.mxu0
      %v444 = vadd.f32 %v372, %v443
      %v445 = vpop.f32.mrf.mxu0
      %446 = vdwg.mxu0
      %vm447 = vcmask 17408
      %448 = vst.msk [vmem:[#allocation4] sm:$0x3] %vm447, %v444
    $region29: #{tpu_custom_call.1} parent=1 // pred_fallthru
      _
    // Predicated region
    $region30: #{tpu_custom_call.1} parent=1 // pred_check
      _
    $region31: #{tpu_custom_call.1} parent=1 // pred_check_branch
      %450 = sbr.rel (0) target = $region33
    $region32: #{tpu_custom_call.1} parent=1 // pred_region
      %s452 = ssub.s32 32, 32
      %453 = vsyncadd [#allocation5], %s452
      %s455 = sshll.u32 [#allocation4], 4
      %s456 = int_to_ptr.vmem [resolvable:$true] %s455
      %458 = dma.vmem_to_hbm [thread:$0]  %s456, 32, %s5, [#allocation5]
    $region33: #{tpu_custom_call.1} parent=1 // pred_fallthru
      _
    // Predicated region
    $region34: #{tpu_custom_call.1} parent=1 // pred_check
      _
    $region35: #{tpu_custom_call.1} parent=1 // pred_check_branch
      %460 = sbr.rel (0) target = $region37
    $region36: #{tpu_custom_call.1} parent=1 // pred_region
      %461 = dma.done [#allocation5], 32
    $region37: #{tpu_custom_call.1} parent=1 // pred_fallthru
      _
    %462 = vsyncpa [#allocation5], 1

</llo_original>
